<compile_context>
chip_gen: v6e
topology: v6e:2x2x1
jax: 0.10.0
libtpu: 0.0.40
codegen_flags: <defaults>
</compile_context>

<pallas_src>
import jax
import jax.numpy as jnp
from jax import lax
from jax.experimental import pallas as pl
from jax.experimental.pallas import tpu as pltpu

OUT_ROWS = 8        # fc3 output (2) padded up to one sublane group for aligned stores
MAX_TILE_B = 1024   # max batch tile (keeps activations comfortably inside VMEM)


def _round_up(n, m):
    return (n + m - 1) // m * m


def _pick_batch_tile(batch):
    if batch <= MAX_TILE_B:
        return max(16, _round_up(batch, 16))   # single grid step, sublane-aligned
    return MAX_TILE_B                          # multiple steps; 1024 % 128 == 0


def doa_kernel(x_ref, w1_ref, b1_ref, w2_ref, b2_ref, w3t_ref, out_ref):
    # x_ref  : (TILE_B, 2*in)   bf16  laid out as [xr | xi]
    # w1_ref : (2*in, 2*h)      bf16  block matrix [[W1r, W1i], [-W1i, W1r]]
    # b1_ref : (1, 2*h)         f32   [b1r | b1i]
    # w2_ref : (2*h, 2*h)       bf16  block matrix [[W2r, W2i], [-W2i, W2r]]
    # b2_ref : (1, 2*h)         f32   [b2r | b2i]
    # w3t_ref: (OUT_ROWS, 2*h)  bf16  fc3 weight transposed, zero-padded past row 1
    # out_ref: (OUT_ROWS, TILE_B) f32 transposed output (lane-dense over batch)
    x = x_ref[...]

    # ---- fc1 (fused ComplexLinear) + complex ReLU ----
    h1 = jnp.dot(x, w1_ref[...], preferred_element_type=jnp.float32) + b1_ref[...]
    h1 = jnp.maximum(h1, 0.0).astype(jnp.bfloat16)           # [h1r | h1i]

    # ---- fc2 (fused ComplexLinear) + complex ReLU ----
    h2 = jnp.dot(h1, w2_ref[...], preferred_element_type=jnp.float32) + b2_ref[...]
    h2 = jnp.maximum(h2, 0.0).astype(jnp.bfloat16)           # [h2r | h2i]

    # ---- fc3: cat([re, im]) is already the lane layout of h2.  Compute it
    # transposed ((OUT_ROWS, 2h) x (TILE_B, 2h)^T) so the store is lane-dense
    # along the batch axis with only OUT_ROWS rows of writeback.
    out_ref[...] = lax.dot_general(
        w3t_ref[...], h2,
        dimension_numbers=(((1,), (1,)), ((), ())),
        preferred_element_type=jnp.float32)


def fuse_params(params):
    """Build fused block weights / concatenated biases from the raw params."""
    (w1r, w1i, b1r, b1i, w2r, w2i, b2r, b2i, w3) = params
    w1 = jnp.concatenate(
        [jnp.concatenate([w1r, w1i], axis=1),
         jnp.concatenate([-w1i, w1r], axis=1)], axis=0).astype(jnp.bfloat16)
    b1 = jnp.concatenate([b1r, b1i], axis=1).astype(jnp.float32)
    w2 = jnp.concatenate(
        [jnp.concatenate([w2r, w2i], axis=1),
         jnp.concatenate([-w2i, w2r], axis=1)], axis=0).astype(jnp.bfloat16)
    b2 = jnp.concatenate([b2r, b2i], axis=1).astype(jnp.float32)
    # fc3 weight transposed and zero-padded from 2 to OUT_ROWS rows.
    w3t = jnp.pad(w3.T, ((0, OUT_ROWS - w3.shape[1]), (0, 0))).astype(jnp.bfloat16)
    return w1, b1, w2, b2, w3t


def doa_forward(x_complex, params):
    """x_complex: complex64 (B, input_dim). Returns float32 (B, 2)."""
    w1, b1, w2, b2, w3t = fuse_params(params)

    xr = jnp.real(x_complex).astype(jnp.float32)
    xi = jnp.imag(x_complex).astype(jnp.float32)
    x = jnp.concatenate([xr, xi], axis=-1).astype(jnp.bfloat16)   # (B, 2*in)

    batch, two_in = x.shape
    two_h = w1.shape[1]

    tile_b = _pick_batch_tile(batch)
    batch_p = _round_up(batch, tile_b)
    if batch_p != batch:
        x = jnp.pad(x, ((0, batch_p - batch), (0, 0)))

    grid = (batch_p // tile_b,)

    out_t = pl.pallas_call(
        doa_kernel,
        out_shape=jax.ShapeDtypeStruct((OUT_ROWS, batch_p), jnp.float32),
        grid=grid,
        in_specs=[
            pl.BlockSpec((tile_b, two_in), lambda i: (i, 0)),     # x: batch-tiled
            pl.BlockSpec((two_in, two_h), lambda i: (0, 0)),      # w1: resident
            pl.BlockSpec((1, two_h), lambda i: (0, 0)),           # b1: resident
            pl.BlockSpec((two_h, two_h), lambda i: (0, 0)),       # w2: resident
            pl.BlockSpec((1, two_h), lambda i: (0, 0)),           # b2: resident
            pl.BlockSpec((OUT_ROWS, two_h), lambda i: (0, 0)),    # w3t: resident
        ],
        out_specs=pl.BlockSpec((OUT_ROWS, tile_b), lambda i: (0, i)),
        compiler_params=pltpu.CompilerParams(
            dimension_semantics=("parallel",)),
    )(x, w1, b1, w2, b2, w3t)

    return out_t[:2, :batch].T   # (B, 2)


def init_params(key, input_dim, hidden_dim):
    """Deterministic synthetic parameters (weights stored as (in, out))."""
    ks = jax.random.split(key, 9)
    s1 = 1.0 / jnp.sqrt(input_dim)
    s2 = 1.0 / jnp.sqrt(hidden_dim)
    s3 = 1.0 / jnp.sqrt(2 * hidden_dim)
    w1r = jax.random.uniform(ks[0], (input_dim, hidden_dim), jnp.float32, -s1, s1)
    w1i = jax.random.uniform(ks[1], (input_dim, hidden_dim), jnp.float32, -s1, s1)
    b1r = jax.random.uniform(ks[2], (1, hidden_dim), jnp.float32, -s1, s1)
    b1i = jax.random.uniform(ks[3], (1, hidden_dim), jnp.float32, -s1, s1)
    w2r = jax.random.uniform(ks[4], (hidden_dim, hidden_dim), jnp.float32, -s2, s2)
    w2i = jax.random.uniform(ks[5], (hidden_dim, hidden_dim), jnp.float32, -s2, s2)
    b2r = jax.random.uniform(ks[6], (1, hidden_dim), jnp.float32, -s2, s2)
    b2i = jax.random.uniform(ks[7], (1, hidden_dim), jnp.float32, -s2, s2)
    w3 = jax.random.uniform(ks[8], (2 * hidden_dim, 2), jnp.float32, -s3, s3)
    return (w1r, w1i, b1r, b1i, w2r, w2i, b2r, b2i, w3)


def doa_reference(x_complex, params):
    """Plain-JAX f32 reference mirroring the PyTorch module."""
    (w1r, w1i, b1r, b1i, w2r, w2i, b2r, b2i, w3) = params
    xr = jnp.real(x_complex).astype(jnp.float32)
    xi = jnp.imag(x_complex).astype(jnp.float32)
    h1r = jnp.maximum(xr @ w1r - xi @ w1i + b1r, 0.0)
    h1i = jnp.maximum(xr @ w1i + xi @ w1r + b1i, 0.0)
    h2r = jnp.maximum(h1r @ w2r - h1i @ w2i + b2r, 0.0)
    h2i = jnp.maximum(h1r @ w2i + h1i @ w2r + b2i, 0.0)
    return jnp.concatenate([h2r, h2i], axis=-1) @ w3


if __name__ == "__main__":
    batch = 8
    input_dim = 16
    hidden_dim = 32

    key = jax.random.PRNGKey(0)
    k_re, k_im, k_params = jax.random.split(key, 3)
    x = (jax.random.normal(k_re, (batch, input_dim), jnp.float32)
         + 1j * jax.random.normal(k_im, (batch, input_dim), jnp.float32)
         ).astype(jnp.complex64)

    params = init_params(k_params, input_dim, hidden_dim)

    angles = doa_forward(x, params)
    angles = jax.block_until_ready(angles)

    ref = doa_reference(x, params)
    assert angles.shape == (batch, 2)
    # bf16 MXU dots with f32 accumulation -> relaxed tolerance vs f32 reference.
    assert jnp.allclose(angles, ref, atol=2e-2, rtol=2e-2)

    print("KERNEL_OK")
</pallas_src>

<mosaic_0001>
module attributes {stable_mosaic.version = 11 : i64} {
  func.func @doa_kernel(%arg0: i32, %arg1: memref<16x32xbf16, #tpu.memory_space<vmem>>, %arg2: memref<32x64xbf16, #tpu.memory_space<vmem>>, %arg3: memref<1x64xf32, #tpu.memory_space<vmem>>, %arg4: memref<64x64xbf16, #tpu.memory_space<vmem>>, %arg5: memref<1x64xf32, #tpu.memory_space<vmem>>, %arg6: memref<8x64xbf16, #tpu.memory_space<vmem>>, %arg7: memref<8x16xf32, #tpu.memory_space<vmem>>) attributes {dimension_semantics = [#tpu.dimension_semantics<parallel>], iteration_bounds = array<i64: 1>, scalar_prefetch = 0 : i64, scratch_operands = 0 : i64, tpu.core_type = #tpu.core_type<tc>, window_params = [{transform_indices = @transform_0, window_bounds = array<i64: 16, 32>}, {pipeline_mode = #tpu.pipeline_mode<synchronous>, transform_indices = @transform_1, window_bounds = array<i64: 32, 64>}, {pipeline_mode = #tpu.pipeline_mode<synchronous>, transform_indices = @transform_2, window_bounds = array<i64: 1, 64>}, {pipeline_mode = #tpu.pipeline_mode<synchronous>, transform_indices = @transform_3, window_bounds = array<i64: 64, 64>}, {pipeline_mode = #tpu.pipeline_mode<synchronous>, transform_indices = @transform_4, window_bounds = array<i64: 1, 64>}, {pipeline_mode = #tpu.pipeline_mode<synchronous>, transform_indices = @transform_5, window_bounds = array<i64: 8, 64>}, {transform_indices = @transform_6, window_bounds = array<i64: 8, 16>}]} {
    %c0 = arith.constant 0 : index
    %c0_0 = arith.constant 0 : index
    %0 = vector.load %arg1[%c0, %c0_0] : memref<16x32xbf16, #tpu.memory_space<vmem>>, vector<16x32xbf16>
    %c0_1 = arith.constant 0 : index
    %c0_2 = arith.constant 0 : index
    %1 = vector.load %arg2[%c0_1, %c0_2] : memref<32x64xbf16, #tpu.memory_space<vmem>>, vector<32x64xbf16>
    %cst = arith.constant dense<0.000000e+00> : vector<16x64xf32>
    %2 = tpu.matmul %0, %1, %cst {dimension_numbers = #tpu.dot_dimension_numbers<[1], [0], [0], [1], [0, 0, 1, 1], [], []>} : vector<16x32xbf16>, vector<32x64xbf16>, vector<16x64xf32> -> vector<16x64xf32>
    %c0_3 = arith.constant 0 : index
    %c0_4 = arith.constant 0 : index
    %3 = vector.load %arg3[%c0_3, %c0_4] : memref<1x64xf32, #tpu.memory_space<vmem>>, vector<1x64xf32>
    %4 = vector.broadcast %3 : vector<1x64xf32> to vector<16x64xf32>
    %5 = arith.addf %2, %4 : vector<16x64xf32>
    %cst_5 = arith.constant 0.000000e+00 : f32
    %6 = vector.broadcast %cst_5 : f32 to vector<16x64xf32>
    %7 = arith.maximumf %5, %6 : vector<16x64xf32>
    %8 = arith.truncf %7 : vector<16x64xf32> to vector<16x64xbf16>
    %c0_6 = arith.constant 0 : index
    %c0_7 = arith.constant 0 : index
    %9 = vector.load %arg4[%c0_6, %c0_7] : memref<64x64xbf16, #tpu.memory_space<vmem>>, vector<64x64xbf16>
    %cst_8 = arith.constant dense<0.000000e+00> : vector<16x64xf32>
    %10 = tpu.matmul %8, %9, %cst_8 {dimension_numbers = #tpu.dot_dimension_numbers<[1], [0], [0], [1], [0, 0, 1, 1], [], []>} : vector<16x64xbf16>, vector<64x64xbf16>, vector<16x64xf32> -> vector<16x64xf32>
    %c0_9 = arith.constant 0 : index
    %c0_10 = arith.constant 0 : index
    %11 = vector.load %arg5[%c0_9, %c0_10] : memref<1x64xf32, #tpu.memory_space<vmem>>, vector<1x64xf32>
    %12 = vector.broadcast %11 : vector<1x64xf32> to vector<16x64xf32>
    %13 = arith.addf %10, %12 : vector<16x64xf32>
    %cst_11 = arith.constant 0.000000e+00 : f32
    %14 = vector.broadcast %cst_11 : f32 to vector<16x64xf32>
    %15 = arith.maximumf %13, %14 : vector<16x64xf32>
    %16 = arith.truncf %15 : vector<16x64xf32> to vector<16x64xbf16>
    %c0_12 = arith.constant 0 : index
    %c0_13 = arith.constant 0 : index
    %17 = vector.load %arg6[%c0_12, %c0_13] : memref<8x64xbf16, #tpu.memory_space<vmem>>, vector<8x64xbf16>
    %cst_14 = arith.constant dense<0.000000e+00> : vector<8x16xf32>
    %18 = tpu.matmul %17, %16, %cst_14 {dimension_numbers = #tpu.dot_dimension_numbers<[1], [1], [0], [0], [0, 0, 1, 0], [], []>} : vector<8x64xbf16>, vector<16x64xbf16>, vector<8x16xf32> -> vector<8x16xf32>
    %c0_15 = arith.constant 0 : index
    %c0_16 = arith.constant 0 : index
    %19 = vector.load %arg7[%c0_15, %c0_16] : memref<8x16xf32, #tpu.memory_space<vmem>>, vector<8x16xf32>
    tpu.vector_store %arg7[%c0_15, %c0_16], %18 {strides = array<i32>} : memref<8x16xf32, #tpu.memory_space<vmem>>, vector<8x16xf32>,
    return
  }
  func.func @transform_0(%arg0: i32) -> (i32, i32) {
    %c0_i32 = arith.constant 0 : i32
    %c0_i32_0 = arith.constant 0 : i32
    return %arg0, %c0_i32 : i32, i32
  }
  func.func @transform_1(%arg0: i32) -> (i32, i32) {
    %c0_i32 = arith.constant 0 : i32
    %c0_i32_0 = arith.constant 0 : i32
    %c0_i32_1 = arith.constant 0 : i32
    return %c0_i32, %c0_i32_0 : i32, i32
  }
  func.func @transform_2(%arg0: i32) -> (i32, i32) {
    %c0_i32 = arith.constant 0 : i32
    %c0_i32_0 = arith.constant 0 : i32
    %c0_i32_1 = arith.constant 0 : i32
    return %c0_i32, %c0_i32_0 : i32, i32
  }
  func.func @transform_3(%arg0: i32) -> (i32, i32) {
    %c0_i32 = arith.constant 0 : i32
    %c0_i32_0 = arith.constant 0 : i32
    %c0_i32_1 = arith.constant 0 : i32
    return %c0_i32, %c0_i32_0 : i32, i32
  }
  func.func @transform_4(%arg0: i32) -> (i32, i32) {
    %c0_i32 = arith.constant 0 : i32
    %c0_i32_0 = arith.constant 0 : i32
    %c0_i32_1 = arith.constant 0 : i32
    return %c0_i32, %c0_i32_0 : i32, i32
  }
  func.func @transform_5(%arg0: i32) -> (i32, i32) {
    %c0_i32 = arith.constant 0 : i32
    %c0_i32_0 = arith.constant 0 : i32
    %c0_i32_1 = arith.constant 0 : i32
    return %c0_i32, %c0_i32_0 : i32, i32
  }
  func.func @transform_6(%arg0: i32) -> (i32, i32) {
    %c0_i32 = arith.constant 0 : i32
    %c0_i32_0 = arith.constant 0 : i32
    return %c0_i32, %arg0 : i32, i32
  }
}

</mosaic_0001>

<llo_original>
// kernel: tpu_custom_call.1
$region0: #{tpu_custom_call.1}
  #allocation0 [shape = 'u32[]', space=smem, size = 0x4, offset = 0x4, fixed_abs, tag = 'smem constant byte address 0x4 - core index']
  #allocation1 [shape = 'u32[144,128]{1,0:T(1,128)}', space=vmem, size = 0x12000, scoped, tag = 'internal scratch']
  %s0 = inlined_call_operand.hbm [shape: bf16[16,32], index: 0, kind: input, shape index: {}]
  %s1 = inlined_call_operand.hbm [shape: bf16[32,64], index: 1, kind: input, shape index: {}]
  %s2 = inlined_call_operand.vmem [shape: f32[1,64], index: 2, kind: input, shape index: {}]
  %s3 = inlined_call_operand.hbm [shape: bf16[64,64], index: 3, kind: input, shape index: {}]
  %s4 = inlined_call_operand.vmem [shape: f32[1,64], index: 4, kind: input, shape index: {}]
  %s5 = inlined_call_operand.vmem [shape: bf16[8,64], index: 5, kind: input, shape index: {}]
  %s6 = inlined_call_operand.hbm [shape: f32[8,16], index: 6, kind: output, shape index: {}]
  %s7 = sld [smem:[#allocation0]]
  $region46: #{tpu_custom_call.1} parent=0
    _
  %s9 = ssub.s32 1, %s7
  %s10 = scalar_select 0, %s9, %s7
  $region1: #{tpu_custom_call.1} parent=0
    #allocation2 [shape = 'u8[4096]{0}', space=vmem, size = 0x1000, scoped, tag = 'input window, operand 0, single buffered']
    #allocation3 [shape = 's32[1]{0}', space=sflag, size = 0x4, scoped, tag = 'scoped memory for tpu_custom_call.1']
    #allocation4 [shape = 's32[1]{0}', space=sflag, size = 0x4, scoped, tag = 'scoped memory for tpu_custom_call.1']
    #allocation5 [shape = 'u8[8192]{0}', space=vmem, size = 0x2000, scoped, tag = 'input window, operand 1, single buffered']
    #allocation6 [shape = 's32[1]{0}', space=sflag, size = 0x4, scoped, tag = 'scoped memory for tpu_custom_call.1']
    #allocation7 [shape = 'u8[16384]{0}', space=vmem, size = 0x4000, scoped, tag = 'input window, operand 3, single buffered']
    #allocation8 [shape = 'u8[4096]{0}', space=vmem, size = 0x1000, scoped, tag = 'output window, operand 0, single buffered']
    %11 = vsyncpa [#allocation3], 0
    %12 = vsyncpa [#allocation6], 0
    %13 = vsyncpa [#allocation4], 0
    // Predicated region
    $region2: #{tpu_custom_call.1} parent=1 // pred_check
      _
    $region3: #{tpu_custom_call.1} parent=1 // pred_check_branch
      %15 = sbr.rel (0) target = $region5
    $region4: #{tpu_custom_call.1} parent=1 // pred_region
      %s17 = ssub.s32 128, 128
      %18 = vsyncadd [#allocation3], %s17
      %s19 = sshll.u32 [#allocation2], 4
      %s20 = int_to_ptr.vmem [resolvable:$true] %s19
      %25 = dma.hbm_to_vmem [thread:$0]  %s0, 128, %s20, [#allocation3], 64, 64, 4
    $region5: #{tpu_custom_call.1} parent=1 // pred_fallthru
      _
    // Predicated region
    $region6: #{tpu_custom_call.1} parent=1 // pred_check
      _
    $region7: #{tpu_custom_call.1} parent=1 // pred_check_branch
      %27 = sbr.rel (0) target = $region9
    $region8: #{tpu_custom_call.1} parent=1 // pred_region
      %s29 = ssub.s32 256, 256
      %30 = vsyncadd [#allocation6], %s29
      %s31 = sshll.u32 [#allocation5], 4
      %s32 = int_to_ptr.vmem [resolvable:$true] %s31
      %37 = dma.hbm_to_vmem [thread:$0]  %s1, 256, %s32, [#allocation6], 64, 64, 4
    $region9: #{tpu_custom_call.1} parent=1 // pred_fallthru
      _
    // Predicated region
    $region10: #{tpu_custom_call.1} parent=1 // pred_check
      _
    $region11: #{tpu_custom_call.1} parent=1 // pred_check_branch
      %39 = sbr.rel (0) target = $region13
    $region12: #{tpu_custom_call.1} parent=1 // pred_region
      _
    $region13: #{tpu_custom_call.1} parent=1 // pred_fallthru
      _
    // Predicated region
    $region14: #{tpu_custom_call.1} parent=1 // pred_check
      _
    $region15: #{tpu_custom_call.1} parent=1 // pred_check_branch
      %41 = sbr.rel (0) target = $region17
    $region16: #{tpu_custom_call.1} parent=1 // pred_region
      %s43 = ssub.s32 512, 512
      %44 = vsyncadd [#allocation6], %s43
      %s45 = sshll.u32 [#allocation7], 4
      %s46 = int_to_ptr.vmem [resolvable:$true] %s45
      %51 = dma.hbm_to_vmem [thread:$0]  %s3, 512, %s46, [#allocation6], 64, 64, 4
    $region17: #{tpu_custom_call.1} parent=1 // pred_fallthru
      _
    // Predicated region
    $region18: #{tpu_custom_call.1} parent=1 // pred_check
      _
    $region19: #{tpu_custom_call.1} parent=1 // pred_check_branch
      %53 = sbr.rel (0) target = $region21
    $region20: #{tpu_custom_call.1} parent=1 // pred_region
      _
    $region21: #{tpu_custom_call.1} parent=1 // pred_fallthru
      _
    // Predicated region
    $region22: #{tpu_custom_call.1} parent=1 // pred_check
      _
    $region23: #{tpu_custom_call.1} parent=1 // pred_check_branch
      %55 = sbr.rel (0) target = $region25
    $region24: #{tpu_custom_call.1} parent=1 // pred_region
      _
    $region25: #{tpu_custom_call.1} parent=1 // pred_fallthru
      _
    // Predicated region
    $region26: #{tpu_custom_call.1} parent=1 // pred_check
      _
    $region27: #{tpu_custom_call.1} parent=1 // pred_check_branch
      %57 = sbr.rel (0) target = $region29
    $region28: #{tpu_custom_call.1} parent=1 // pred_region
      %58 = dma.done [#allocation3], 128
    $region29: #{tpu_custom_call.1} parent=1 // pred_fallthru
      _
    // Predicated region
    $region30: #{tpu_custom_call.1} parent=1 // pred_check
      _
    $region31: #{tpu_custom_call.1} parent=1 // pred_check_branch
      %60 = sbr.rel (0) target = $region33
    $region32: #{tpu_custom_call.1} parent=1 // pred_region
      %61 = dma.done [#allocation6], 256
    $region33: #{tpu_custom_call.1} parent=1 // pred_fallthru
      _
    // Predicated region
    $region34: #{tpu_custom_call.1} parent=1 // pred_check
      _
    $region35: #{tpu_custom_call.1} parent=1 // pred_check_branch
      %63 = sbr.rel (0) target = $region37
    $region36: #{tpu_custom_call.1} parent=1 // pred_region
      %64 = dma.done [#allocation6], 512
    $region37: #{tpu_custom_call.1} parent=1 // pred_fallthru
      _
    %v66 = vld [vmem:[#allocation2] sm:$0xf]
    %v67 = vld [vmem:[#allocation2 + $0x4] sm:$0xf]
    %v68 = vld [vmem:[#allocation5] sm:$0xf]
    %v69 = vld [vmem:[#allocation5 + $0x4] sm:$0xf]
    %v70 = vld [vmem:[#allocation5 + $0x8] sm:$0xf]
    %v71 = vld [vmem:[#allocation5 + $0xc] sm:$0xf]
    %v72 = vld [vmem:[%s2] sm:$0x1]
    %v74 = vlaneseq
    %v75 = vshrl.u32 %v74, 7
    %v76 = vsub.s32 0, %v75
    %v77 = vrot.slane %v72, %v76
    %v81 = vunpack.c.l.b16 %v66
    %v82 = vunpack.c.l.b16 %v67
    %v83 = vpack.c.b16 %v82, %v81
    %v88 = vunpack.c.l.b16 %v68
    %v89 = vunpack.c.l.b16 %v69
    %v90 = vunpack.c.l.b16 %v70
    %v91 = vunpack.c.l.b16 %v71
    %v92 = vpack.c.b16 %v89, %v88
    %v93 = vpack.c.b16 %v91, %v90
    %vm96 = vcmask 261120
    %v98 = vsel %vm96, %v83, 0
    %100 = vmatprep.subr.bf16.mxu0 0
    %101 = vmatpush1.bf16.msra.mxu0 0
    %102 = vmatprep.subr.bf16.mxu0 0
    %103 = vmatpush1.bf16.msra.mxu0 0
    %104 = vmatprep.subr.bf16.mxu0 0
    %105 = vmatpush1.bf16.msra.mxu0 0
    %106 = vmatprep.subr.bf16.mxu0 0
    %107 = vmatpush1.bf16.msra.mxu0 0
    %108 = vmatprep.subr.bf16.mxu0 0
    %109 = vmatpush1.bf16.msra.mxu0 0
    %110 = vmatprep.subr.bf16.mxu0 0
    %111 = vmatpush1.bf16.msra.mxu0 0
    %112 = vmatprep.subr.bf16.mxu0 0
    %113 = vmatpush1.bf16.msra.mxu0 %v93
    %114 = vmatprep.subr.bf16.mxu0 0
    %115 = vmatpush1.bf16.msra.mxu0 %v92
    %116 = vmatprep.subr.bf16.mxu0 0
    %117 = vmatpush2.bf16.msra.mxu0 0
    %118 = vmatprep.subr.bf16.mxu0 0
    %119 = vmatpush2.bf16.msra.mxu0 0
    %120 = vmatprep.subr.bf16.mxu0 0
    %121 = vmatpush2.bf16.msra.mxu0 0
    %122 = vmatprep.subr.bf16.mxu0 0
    %123 = vmatpush2.bf16.msra.mxu0 0
    %124 = vmatprep.subr.bf16.mxu0 0
    %125 = vmatpush2.bf16.msra.mxu0 0
    %126 = vmatprep.subr.bf16.mxu0 0
    %127 = vmatpush2.bf16.msra.mxu0 0
    %128 = vmatprep.subr.bf16.mxu0 0
    %129 = vmatpush2.bf16.msra.mxu0 0
    %130 = vmatprep.subr.bf16.mxu0 0
    %131 = vmatpush2.bf16.msra.mxu0 0
    %132 = vmatprep.mubr.bf16.mxu0 0
    %133 = vmatmul.mubr.bf16.gmra.mxu0 %v98
    %v134 = vpop.f32.mrf.mxu0
    %v135 = vadd.f32 %v77, %v134
    %v136 = vpop.f32.mrf.mxu0
    %v137 = vpop.f32.mrf.mxu0
    %v138 = vadd.f32 %v77, %v137
    %v139 = vpop.f32.mrf.mxu0
    %140 = vdwg.mxu0
    %v141 = vmax.f32 %v135, 0.0
    %v142 = vmax.f32 %v138, 0.0
    %v143 = vpack.c.bf16 %v142, %v141
    %v144 = vld [vmem:[#allocation7] sm:$0xf]
    %v145 = vld [vmem:[#allocation7 + $0x4] sm:$0xf]
    %v146 = vld [vmem:[#allocation7 + $0x8] sm:$0xf]
    %v147 = vld [vmem:[#allocation7 + $0xc] sm:$0xf]
    %v148 = vld [vmem:[#allocation7 + $0x10] sm:$0xf]
    %v149 = vld [vmem:[#allocation7 + $0x14] sm:$0xf]
    %v150 = vld [vmem:[#allocation7 + $0x18] sm:$0xf]
    %v151 = vld [vmem:[#allocation7 + $0x1c] sm:$0xf]
    %v152 = vld [vmem:[%s4] sm:$0x1]
    %v154 = vlaneseq
    %v155 = vshrl.u32 %v154, 7
    %v156 = vsub.s32 0, %v155
    %v157 = vrot.slane %v152, %v156
    %v167 = vunpack.c.l.b16 %v144
    %v168 = vunpack.c.l.b16 %v145
    %v169 = vunpack.c.l.b16 %v146
    %v170 = vunpack.c.l.b16 %v147
    %v171 = vunpack.c.l.b16 %v148
    %v172 = vunpack.c.l.b16 %v149
    %v173 = vunpack.c.l.b16 %v150
    %v174 = vunpack.c.l.b16 %v151
    %v175 = vpack.c.b16 %v168, %v167
    %v176 = vpack.c.b16 %v170, %v169
    %v177 = vpack.c.b16 %v172, %v171
    %v178 = vpack.c.b16 %v174, %v173
    %vm183 = vcmask 523264
    %v185 = vsel %vm183, %v143, 0
    %187 = vmatprep.subr.bf16.mxu0 0
    %188 = vmatpush1.bf16.msra.mxu0 0
    %189 = vmatprep.subr.bf16.mxu0 0
    %190 = vmatpush1.bf16.msra.mxu0 0
    %191 = vmatprep.subr.bf16.mxu0 0
    %192 = vmatpush1.bf16.msra.mxu0 0
    %193 = vmatprep.subr.bf16.mxu0 0
    %194 = vmatpush1.bf16.msra.mxu0 0
    %195 = vmatprep.subr.bf16.mxu0 0
    %196 = vmatpush1.bf16.msra.mxu0 %v178
    %197 = vmatprep.subr.bf16.mxu0 0
    %198 = vmatpush1.bf16.msra.mxu0 %v177
    %199 = vmatprep.subr.bf16.mxu0 0
    %200 = vmatpush1.bf16.msra.mxu0 %v176
    %201 = vmatprep.subr.bf16.mxu0 0
    %202 = vmatpush1.bf16.msra.mxu0 %v175
    %203 = vmatprep.subr.bf16.mxu0 0
    %204 = vmatpush2.bf16.msra.mxu0 0
    %205 = vmatprep.subr.bf16.mxu0 0
    %206 = vmatpush2.bf16.msra.mxu0 0
    %207 = vmatprep.subr.bf16.mxu0 0
    %208 = vmatpush2.bf16.msra.mxu0 0
    %209 = vmatprep.subr.bf16.mxu0 0
    %210 = vmatpush2.bf16.msra.mxu0 0
    %211 = vmatprep.subr.bf16.mxu0 0
    %212 = vmatpush2.bf16.msra.mxu0 0
    %213 = vmatprep.subr.bf16.mxu0 0
    %214 = vmatpush2.bf16.msra.mxu0 0
    %215 = vmatprep.subr.bf16.mxu0 0
    %216 = vmatpush2.bf16.msra.mxu0 0
    %217 = vmatprep.subr.bf16.mxu0 0
    %218 = vmatpush2.bf16.msra.mxu0 0
    %219 = vmatprep.mubr.bf16.mxu0 0
    %220 = vmatmul.mubr.bf16.gmra.mxu0 %v185
    %v221 = vpop.f32.mrf.mxu0
    %v222 = vadd.f32 %v157, %v221
    %v223 = vpop.f32.mrf.mxu0
    %v224 = vpop.f32.mrf.mxu0
    %v225 = vadd.f32 %v157, %v224
    %v226 = vpop.f32.mrf.mxu0
    %227 = vdwg.mxu0
    %v228 = vmax.f32 %v222, 0.0
    %v229 = vmax.f32 %v225, 0.0
    %v230 = vpack.c.bf16 %v229, %v228
    %v231 = vld [vmem:[%s5] sm:$0xf]
    %v233 = vsel %vm183, %v231, 0
    %v236 = vsel %vm183, %v230, 0
    %238 = vmatprep.subr.bf16.mxu0 0
    %239 = vmatpush1.bf16.xpose.msra.mxu0 0
    %240 = vmatprep.subr.bf16.mxu0 0
    %241 = vmatpush1.bf16.xpose.msra.mxu0 0
    %242 = vmatprep.subr.bf16.mxu0 0
    %243 = vmatpush1.bf16.xpose.msra.mxu0 0
    %244 = vmatprep.subr.bf16.mxu0 0
    %245 = vmatpush1.bf16.xpose.msra.mxu0 0
    %246 = vmatprep.subr.bf16.mxu0 0
    %247 = vmatpush1.bf16.xpose.msra.mxu0 0
    %248 = vmatprep.subr.bf16.mxu0 0
    %249 = vmatpush1.bf16.xpose.msra.mxu0 0
    %250 = vmatprep.subr.bf16.mxu0 0
    %251 = vmatpush1.bf16.xpose.msra.mxu0 0
    %252 = vmatprep.subr.bf16.mxu0 0
    %253 = vmatpush1.bf16.xpose.msra.mxu0 %v236
    %254 = vmatprep.subr.bf16.mxu0 0
    %255 = vmatpush2.bf16.xpose.msra.mxu0 0
    %256 = vmatprep.subr.bf16.mxu0 0
    %257 = vmatpush2.bf16.xpose.msra.mxu0 0
    %258 = vmatprep.subr.bf16.mxu0 0
    %259 = vmatpush2.bf16.xpose.msra.mxu0 0
    %260 = vmatprep.subr.bf16.mxu0 0
    %261 = vmatpush2.bf16.xpose.msra.mxu0 0
    %262 = vmatprep.subr.bf16.mxu0 0
    %263 = vmatpush2.bf16.xpose.msra.mxu0 0
    %264 = vmatprep.subr.bf16.mxu0 0
    %265 = vmatpush2.bf16.xpose.msra.mxu0 0
    %266 = vmatprep.subr.bf16.mxu0 0
    %267 = vmatpush2.bf16.xpose.msra.mxu0 0
    %268 = vmatprep.subr.bf16.mxu0 0
    %269 = vmatpush2.bf16.xpose.msra.mxu0 0
    %270 = vmatprep.mubr.bf16.mxu0 0
    %271 = vmatmul.mubr.bf16.gmra.mxu0 %v233
    %v272 = vpop.f32.mrf.mxu0
    %v273 = vadd.f32 0.0, %v272
    %v274 = vpop.f32.mrf.mxu0
    %v275 = vpop.f32.mrf.mxu0
    %v276 = vpop.f32.mrf.mxu0
    %277 = vdwg.mxu0
    %vm278 = vcmask 130048
    %279 = vst.msk [vmem:[#allocation8] sm:$0xff] %vm278, %v273
    // Predicated region
    $region38: #{tpu_custom_call.1} parent=1 // pred_check
      _
    $region39: #{tpu_custom_call.1} parent=1 // pred_check_branch
      %281 = sbr.rel (0) target = $region41
    $region40: #{tpu_custom_call.1} parent=1 // pred_region
      %s283 = ssub.s32 128, 128
      %284 = vsyncadd [#allocation4], %s283
      %s286 = sshll.u32 [#allocation8], 4
      %s287 = int_to_ptr.vmem [resolvable:$true] %s286
      %289 = dma.vmem_to_hbm [thread:$0]  %s287, 128, %s6, [#allocation4]
    $region41: #{tpu_custom_call.1} parent=1 // pred_fallthru
      _
    // Predicated region
    $region42: #{tpu_custom_call.1} parent=1 // pred_check
      _
    $region43: #{tpu_custom_call.1} parent=1 // pred_check_branch
      %291 = sbr.rel (0) target = $region45
    $region44: #{tpu_custom_call.1} parent=1 // pred_region
      %292 = dma.done [#allocation4], 128
    $region45: #{tpu_custom_call.1} parent=1 // pred_fallthru
      _
    %293 = vsyncpa [#allocation3], 1
    %294 = vsyncpa [#allocation6], 1
    %295 = vsyncpa [#allocation4], 1

</llo_original>
